<compile_context>
chip_gen: v7x
topology: tpu7x:2x2x1
jax: 0.10.0
libtpu: 0.0.40
codegen_flags: <defaults>
</compile_context>

<pallas_src>
import math

import jax
import jax.numpy as jnp
from jax.experimental import pallas as pl
from jax.experimental.pallas import tpu as pltpu

_LANE = 128


def _vmem_budgets() -> tuple[int, int]:
    """(vmem_limit_bytes, per-block byte budget), tuned per TPU generation.

    v5e/v6e (128 MiB physical VMEM): 64 MiB scoped limit, 6 MiB blocks.
    v7x      (64 MiB physical VMEM): 40 MiB scoped limit, 4 MiB blocks.
    Unknown / query failure: the v7x-safe pair (safe on every generation,
    and well above v5e's 16 MiB scoped default).
    """
    try:
        vmem_cap = pltpu.get_tpu_info().vmem_capacity_bytes
    except Exception:
        vmem_cap = 0
    if vmem_cap >= 96 * 1024 * 1024:
        return 64 * 1024 * 1024, 6 * 1024 * 1024
    return 40 * 1024 * 1024, 4 * 1024 * 1024


def _build_pe(d_model: int, max_len: int) -> jnp.ndarray:
    """Sinusoidal table, exactly like the PyTorch module's __init__."""
    assert d_model % 2 == 0, "PositionalEncoding requires an even d_model"
    position = jnp.arange(0, max_len, dtype=jnp.float32)[:, None]            # [max_len, 1]
    div_term = jnp.exp(
        jnp.arange(0, d_model, 2, dtype=jnp.float32) * (-math.log(10000.0) / d_model)
    )                                                                        # [d_model//2]
    angles = position * div_term                                             # [max_len, d_model//2]
    pe = jnp.zeros((max_len, d_model), dtype=jnp.float32)
    pe = pe.at[:, 0::2].set(jnp.sin(angles))
    pe = pe.at[:, 1::2].set(jnp.cos(angles))
    return pe


def _add_pe_kernel(x_ref, pe_ref, o_ref):
    # Batch dim of x/out blocks is squeezed: all refs are (TR, C).
    # Pure mem-bound VPU add: 2 vld + 1 vadd + 1 vst per vreg, no broadcasts.
    o_ref[...] = x_ref[...] + pe_ref[...]


def _row_tile(num_rows: int, row_width: int, itemsize: int, block_budget: int) -> int:
    """Sublane tile: multiple of the packing granularity, fits the VMEM budget."""
    sub = 8 * max(1, 4 // itemsize)          # 8 rows f32, 16 bf16, 32 int8
    max_rows = max(sub, block_budget // max(1, row_width * itemsize))
    if num_rows <= max_rows:
        return num_rows                      # full extent: always layout-legal
    return max(sub, (max_rows // sub) * sub)


def positional_encoding(x: jnp.ndarray, pe_full: jnp.ndarray,
                        donate_x: bool = False) -> jnp.ndarray:
    """x: [B, S, D]; pe_full: [max_len, D]. Returns x + pe[:S] broadcast over batch.

    Set donate_x=True ONLY when the caller actually donates x's buffer (e.g. via
    jax.jit(..., donate_argnums=0)); otherwise aliasing forces XLA to insert a
    defensive copy of x and doubles HBM traffic.
    """
    B, S, D = x.shape
    pe = pe_full[:S, :].astype(x.dtype)      # slice + single cast on the wrapper side

    # Pick a lane-dense per-batch-row 2-D slab (rows, C) with C % 128 == 0 if possible.
    if D % _LANE == 0:
        R, C = S, D                          # already lane-dense; no reshape needed
        x2, pe2 = x, pe
    elif (S * D) % _LANE == 0:
        R, C = (S * D) // _LANE, _LANE       # contiguous flatten -> free layout plumbing
        x2 = x.reshape(B, R, C)
        pe2 = pe.reshape(R, C)
    else:
        # TODO(synk): S*D not a multiple of 128 keeps the (S, D) layout and accepts
        # masked (lane-sparse) stores; a lane-dense bulk + masked tail path would
        # recover ~3-4x on this fallback.
        R, C = S, D
        x2, pe2 = x, pe

    itemsize = jnp.dtype(x.dtype).itemsize
    vmem_limit, block_budget = _vmem_budgets()
    TR = _row_tile(R, C, itemsize, block_budget)
    num_t = pl.cdiv(R, TR)

    out2 = pl.pallas_call(
        _add_pe_kernel,
        out_shape=jax.ShapeDtypeStruct((B, R, C), x.dtype),
        grid_spec=pltpu.PrefetchScalarGridSpec(
            num_scalar_prefetch=0,
            # Batch is the innermost (fastest) axis: pe's block index only changes
            # when the row-tile changes, so pe is DMA'd once per tile, not per step.
            grid=(num_t, B),
            in_specs=[
                pl.BlockSpec((None, TR, C), lambda t, b: (b, t, 0)),   # x (batch squeezed)
                pl.BlockSpec((TR, C), lambda t, b: (t, 0)),            # pe (shared over batch)
            ],
            out_specs=pl.BlockSpec((None, TR, C), lambda t, b: (b, t, 0)),
        ),
        # Only reuse x's HBM buffer when the caller really donates it.
        input_output_aliases=({0: 0} if donate_x else {}),
        # Accurate mem-bound cost for XLA's scheduler: 1 add/elem, stream x in,
        # pe in, out back out; no transcendentals.
        cost_estimate=pl.CostEstimate(
            flops=B * S * D,
            transcendentals=0,
            bytes_accessed=(2 * B * S * D + S * D) * itemsize,
        ),
        compiler_params=pltpu.CompilerParams(
            dimension_semantics=("parallel", "parallel"),
            vmem_limit_bytes=vmem_limit,
        ),
    )(x2, pe2)

    return out2.reshape(B, S, D)


if __name__ == "__main__":
    batch, seq_len, d_model, max_len = 2, 8, 32, 100

    key = jax.random.PRNGKey(0)
    x = jax.random.normal(key, (batch, seq_len, d_model), dtype=jnp.float32)
    pe_full = _build_pe(d_model, max_len)

    # x is NOT donated here (we still need it for the reference check), so the
    # wrapper is called with donate_x=False (the default) and no alias is declared.
    fn = jax.jit(positional_encoding)
    out = jax.block_until_ready(fn(x, pe_full))

    # Reference check in plain JAX.
    ref = x + pe_full[None, :seq_len, :]
    assert out.shape == (batch, seq_len, d_model)
    assert jnp.allclose(out, ref, atol=1e-6), "mismatch vs reference"

    print("KERNEL_OK")
</pallas_src>

<mosaic_0001>
module attributes {stable_mosaic.version = 11 : i64} {
  func.func @_add_pe_kernel(%arg0: i32, %arg1: i32, %arg2: memref<1x2x128xf32, #tpu.memory_space<vmem>>, %arg3: memref<2x128xf32, #tpu.memory_space<vmem>>, %arg4: memref<1x2x128xf32, #tpu.memory_space<vmem>>) attributes {dimension_semantics = [#tpu.dimension_semantics<parallel>, #tpu.dimension_semantics<parallel>], iteration_bounds = array<i64: 1, 2>, scalar_prefetch = 0 : i64, scratch_operands = 0 : i64, tpu.core_type = #tpu.core_type<tc>, window_params = [{transform_indices = @transform_0, window_bounds = array<i64: 1, 2, 128>}, {transform_indices = @transform_1, window_bounds = array<i64: 2, 128>}, {transform_indices = @transform_2, window_bounds = array<i64: 1, 2, 128>}]} {
    %c0 = arith.constant 0 : index
    %c0_0 = arith.constant 0 : index
    %c0_1 = arith.constant 0 : index
    %0 = vector.load %arg2[%c0, %c0_0, %c0_1] : memref<1x2x128xf32, #tpu.memory_space<vmem>>, vector<1x2x128xf32>
    %1 = vector.shape_cast %0 : vector<1x2x128xf32> to vector<2x128xf32>
    %c0_2 = arith.constant 0 : index
    %c0_3 = arith.constant 0 : index
    %2 = vector.load %arg3[%c0_2, %c0_3] : memref<2x128xf32, #tpu.memory_space<vmem>>, vector<2x128xf32>
    %3 = arith.addf %1, %2 : vector<2x128xf32>
    %c0_4 = arith.constant 0 : index
    %c0_5 = arith.constant 0 : index
    %c0_6 = arith.constant 0 : index
    %4 = vector.load %arg4[%c0_4, %c0_5, %c0_6] : memref<1x2x128xf32, #tpu.memory_space<vmem>>, vector<1x2x128xf32>
    %5 = vector.shape_cast %4 : vector<1x2x128xf32> to vector<2x128xf32>
    %6 = vector.shape_cast %3 : vector<2x128xf32> to vector<1x2x128xf32>
    tpu.vector_store %arg4[%c0_4, %c0_5, %c0_6], %6 {strides = array<i32>} : memref<1x2x128xf32, #tpu.memory_space<vmem>>, vector<1x2x128xf32>,
    return
  }
  func.func @transform_0(%arg0: i32, %arg1: i32) -> (i32, i32, i32) {
    %c0_i32 = arith.constant 0 : i32
    %c0_i32_0 = arith.constant 0 : i32
    return %arg1, %arg0, %c0_i32 : i32, i32, i32
  }
  func.func @transform_1(%arg0: i32, %arg1: i32) -> (i32, i32) {
    %c0_i32 = arith.constant 0 : i32
    %c0_i32_0 = arith.constant 0 : i32
    return %arg0, %c0_i32 : i32, i32
  }
  func.func @transform_2(%arg0: i32, %arg1: i32) -> (i32, i32, i32) {
    %c0_i32 = arith.constant 0 : i32
    %c0_i32_0 = arith.constant 0 : i32
    return %arg1, %arg0, %c0_i32 : i32, i32, i32
  }
}

</mosaic_0001>

<llo_original>
// kernel: positional_encoding.1
$region0: #{positional_encoding.1}
  #allocation0 [shape = 'u32[]', space=smem, size = 0x4, offset = 0x4, fixed_abs, tag = 'smem constant byte address 0x4 - core index']
  #allocation1 [shape = 'u32[144,128]{1,0:T(1,128)}', space=vmem, size = 0x12000, scoped, tag = 'internal scratch']
  %s0 = inlined_call_operand.vmem [shape: f32[2,2,128], index: 0, kind: input, shape index: {}]
  %s1 = inlined_call_operand.vmem [shape: f32[2,128], index: 1, kind: input, shape index: {}]
  %s2 = inlined_call_operand.vmem [shape: f32[2,2,128], index: 2, kind: output, shape index: {}]
  %s3 = sld [smem:[#allocation0]]
  $region41: #{positional_encoding.1} parent=0
    _
  %s5 = ssub.s32 1, %s3
  %s6 = scalar_select 0, %s5, %s3
  loop: start=0, step=1, limit=4
  $region2: #{positional_encoding.1} parent=0 // loop_pre_header
    _
  $region3: #{positional_encoding.1} parent=0 // loop_header
    %s8 = sphi 0, %s12
    %p9 = scmp.ge.s32.totalorder %s8, 4
    %s15 = sphi 0, %s27
    %s16 = sphi 0, %s23
    %s17 = sphi 0, %s15
    %s18 = sphi 0, %s16
    %s19 = sphi 0, %s17
    %s20 = sphi 0, %s18
    %s32 = sphi 0, %s34
    %s35 = sphi 0, %s32
    %s36 = sphi 0, %s35
    %s52 = sphi 0, %s36
    %s58 = sphi 0, %s60
    %s61 = sphi 0, %s58
    %s62 = sphi 0, %s61
    %s78 = sphi 0, %s62
    %s86 = sphi 0, %s88
    %s89 = sphi 0, %s86
    %s90 = sphi 0, %s89
    %s106 = sphi 0, %s90
  $region4: #{positional_encoding.1} parent=0 // loop_header_branch
    %11 = sbr.rel (%p9) target = $region8
  $region5: #{positional_encoding.1} parent=0 // loop_body
    %s13 = ssub.s32 %s8, 1
    %s14 = ssub.s32 %s8, 2
    %s21 = sadd.s32 1, %s16
    %p22 = scmp.ge.s32.totalorder %s21, 2
    %s23 = scalar_select %p22, 0, %s21
    %s24 = sadd.s32 1, %s15
    %s25 = scalar_select %p22, %s24, %s15
    %p26 = scmp.ge.s32.totalorder %s25, 1
    %s27 = scalar_select %p26, 0, %s25
    %s28 = ssub.s32 %s16, %s23
    %s29 = ssub.s32 %s15, %s27
    %s30 = sor.u32 %s28, %s29
    %p31 = scmp.eq.s32.totalorder %s30, 0
    %s33 = sadd.s32 %s32, 1
    %s34 = scalar_select %p31, %s32, %s33
    %p37 = pneg %p31
    %p38 = scmp.eq.s32.totalorder %s8, 1
    %p39 = por %p37, %p38
    %p40 = scmp.ne.s32.totalorder %s32, %s35
    %p41 = scmp.eq.s32.totalorder %s8, 0
    %p42 = por %p40, %p41
    %p43 = scmp.ne.s32.totalorder %s32, %s35
    %p44 = scmp.eq.s32.totalorder %s13, 1
    %p45 = por %p43, %p44
    %p46 = scmp.ne.s32.totalorder %s35, %s36
    %p47 = scmp.eq.s32.totalorder %s13, 0
    %p48 = por %p46, %p47
    %p49 = scmp.ne.s32.totalorder %s35, %s36
    %p50 = scmp.eq.s32.totalorder %s14, 1
    %p51 = por %p49, %p50
    %p53 = scmp.ne.s32.totalorder %s36, %s52
    %p54 = scmp.eq.s32.totalorder %s14, 0
    %p55 = por %p53, %p54
    %s56 = ssub.s32 %s15, %s27
    %p57 = scmp.eq.s32.totalorder %s56, 0
    %s59 = sadd.s32 %s58, 1
    %s60 = scalar_select %p57, %s58, %s59
    %p63 = pneg %p57
    %p64 = scmp.eq.s32.totalorder %s8, 1
    %p65 = por %p63, %p64
    %p66 = scmp.ne.s32.totalorder %s58, %s61
    %p67 = scmp.eq.s32.totalorder %s8, 0
    %p68 = por %p66, %p67
    %p69 = scmp.ne.s32.totalorder %s58, %s61
    %p70 = scmp.eq.s32.totalorder %s13, 1
    %p71 = por %p69, %p70
    %p72 = scmp.ne.s32.totalorder %s61, %s62
    %p73 = scmp.eq.s32.totalorder %s13, 0
    %p74 = por %p72, %p73
    %p75 = scmp.ne.s32.totalorder %s61, %s62
    %p76 = scmp.eq.s32.totalorder %s14, 1
    %p77 = por %p75, %p76
    %p79 = scmp.ne.s32.totalorder %s62, %s78
    %p80 = scmp.eq.s32.totalorder %s14, 0
    %p81 = por %p79, %p80
    %s82 = ssub.s32 %s16, %s23
    %s83 = ssub.s32 %s15, %s27
    %s84 = sor.u32 %s82, %s83
    %p85 = scmp.eq.s32.totalorder %s84, 0
    %s87 = sadd.s32 %s86, 1
    %s88 = scalar_select %p85, %s86, %s87
    %p91 = pneg %p85
    %p92 = scmp.eq.s32.totalorder %s8, 1
    %p93 = por %p91, %p92
    %p94 = scmp.ne.s32.totalorder %s86, %s89
    %p95 = scmp.eq.s32.totalorder %s8, 0
    %p96 = por %p94, %p95
    %p97 = scmp.ne.s32.totalorder %s86, %s89
    %p98 = scmp.eq.s32.totalorder %s13, 1
    %p99 = por %p97, %p98
    %p100 = scmp.ne.s32.totalorder %s89, %s90
    %p101 = scmp.eq.s32.totalorder %s13, 0
    %p102 = por %p100, %p101
    %p103 = scmp.ne.s32.totalorder %s89, %s90
    %p104 = scmp.eq.s32.totalorder %s14, 1
    %p105 = por %p103, %p104
    %p107 = scmp.ne.s32.totalorder %s90, %s106
    %p108 = scmp.eq.s32.totalorder %s14, 0
    %p109 = por %p107, %p108
    %p110 = scmp.le.s32.totalorder 1, %s8
    %p111 = scmp.lt.s32.totalorder %s8, 3
    %p112 = pnand %p110, %p111
    %p113 = pneg %p112
    // Predicated region
    $region9: #{positional_encoding.1} parent=5 // pred_check
      _
    $region10: #{positional_encoding.1} parent=5 // pred_check_branch
      %115 = sbr.rel (%p112) target = $region12
    $region11: #{positional_encoding.1} parent=5 // pred_region
      %s116 = ssub.s32 %s8, 1
      // Predicated region
      $region13: #{positional_encoding.1} parent=11 // pred_check
        %p117 = pneg %p74
      $region14: #{positional_encoding.1} parent=11 // pred_check_branch
        %119 = sbr.rel (%p117) target = $region16
      $region15: #{positional_encoding.1} parent=11 // pred_region
        %p120 = scmp.lt.s32.totalorder %s17, 0
        %s121 = scalar_select %p120, %s17, 0
        %s122 = smul.addr %s121, 2
        %s123 = scalar_lea.vmem %s1, %s122
      $region16: #{positional_encoding.1} parent=11 // pred_fallthru
        _
    $region12: #{positional_encoding.1} parent=5 // pred_fallthru
      _
    %p124 = scmp.lt.s32.totalorder %s8, 2
    // Predicated region
    $region17: #{positional_encoding.1} parent=5 // pred_check
      %p125 = pneg %p124
    $region18: #{positional_encoding.1} parent=5 // pred_check_branch
      %127 = sbr.rel (%p125) target = $region20
    $region19: #{positional_encoding.1} parent=5 // pred_region
      // Predicated region
      $region21: #{positional_encoding.1} parent=19 // pred_check
        %p128 = pneg %p42
      $region22: #{positional_encoding.1} parent=19 // pred_check_branch
        %130 = sbr.rel (%p128) target = $region24
      $region23: #{positional_encoding.1} parent=19 // pred_region
        %p131 = scmp.lt.s32.totalorder %s16, 1
        %s132 = scalar_select %p131, %s16, 1
        %p133 = scmp.lt.s32.totalorder %s15, 0
        %s134 = scalar_select %p133, %s15, 0
        %s135 = sadd.s32 %s134, %s132
        %s136 = smul.addr %s135, 2
        %s137 = scalar_lea.vmem %s0, %s136
      $region24: #{positional_encoding.1} parent=19 // pred_fallthru
        _
    $region20: #{positional_encoding.1} parent=5 // pred_fallthru
      _
    %p138 = scmp.le.s32.totalorder 1, %s8
    %p139 = scmp.lt.s32.totalorder %s8, 3
    %p140 = pnand %p138, %p139
    %p141 = pneg %p140
    // Predicated region
    $region25: #{positional_encoding.1} parent=5 // pred_check
      _
    $region26: #{positional_encoding.1} parent=5 // pred_check_branch
      %143 = sbr.rel (%p140) target = $region28
    $region27: #{positional_encoding.1} parent=5 // pred_region
      %s144 = ssub.s32 %s8, 1
      %p145 = scmp.lt.s32.totalorder %s18, 1
      %s146 = scalar_select %p145, %s18, 1
      %p147 = scmp.lt.s32.totalorder %s17, 0
      %s148 = scalar_select %p147, %s17, 0
      %s149 = sadd.s32 %s148, %s146
      %s150 = smul.addr %s149, 2
      %s151 = scalar_lea.vmem %s0, %s150
      %p152 = pneg %p48
      %p153 = pneg %p45
      %p154 = scmp.lt.s32.totalorder %s17, 0
      %s155 = scalar_select %p154, %s17, 0
      %s156 = smul.addr %s155, 2
      %s157 = scalar_lea.vmem %s1, %s156
      %p158 = pneg %p74
      %p159 = pneg %p71
      %p160 = pneg %p102
      %p161 = pneg %p99
      %p162 = scmp.lt.s32.totalorder %s18, 1
      %s163 = scalar_select %p162, %s18, 1
      %p164 = scmp.lt.s32.totalorder %s17, 0
      %s165 = scalar_select %p164, %s17, 0
      %s166 = sadd.s32 %s165, %s163
      %s167 = smul.addr %s166, 2
      %s168 = scalar_lea.vmem %s2, %s167
      %p169 = scmp.lt.s32.totalorder %s18, 1
      %s170 = scalar_select %p169, %s18, 1
      %p171 = scmp.lt.s32.totalorder %s17, 0
      %s172 = scalar_select %p171, %s17, 0
      %s173 = sadd.s32 %s172, %s170
      %s174 = smul.addr %s173, 2
      %s175 = scalar_lea.vmem %s0, %s174
      %p176 = scmp.lt.s32.totalorder %s17, 0
      %s177 = scalar_select %p176, %s17, 0
      %s178 = smul.addr %s177, 2
      %s179 = scalar_lea.vmem %s1, %s178
      %p180 = scmp.lt.s32.totalorder %s18, 1
      %s181 = scalar_select %p180, %s18, 1
      %p182 = scmp.lt.s32.totalorder %s17, 0
      %s183 = scalar_select %p182, %s17, 0
      %s184 = sadd.s32 %s183, %s181
      %s185 = smul.addr %s184, 2
      %s186 = scalar_lea.vmem %s2, %s185
      %v187 = vld [vmem:[%s175] sm:$0x3]
      %v188 = vld [vmem:[%s179] sm:$0x3]
      %v189 = vadd.f32 %v187, %v188
      %190 = vst [vmem:[%s186] sm:$0x3] %v189
      %p191 = scmp.lt.s32.totalorder %s18, 1
      %s192 = scalar_select %p191, %s18, 1
      %p193 = scmp.lt.s32.totalorder %s17, 0
      %s194 = scalar_select %p193, %s17, 0
      %s195 = sadd.s32 %s194, %s192
      %s196 = smul.addr %s195, 2
      %s197 = scalar_lea.vmem %s2, %s196
      // Predicated region
      $region29: #{positional_encoding.1} parent=27 // pred_check
        %p198 = pneg %p99
      $region30: #{positional_encoding.1} parent=27 // pred_check_branch
        %200 = sbr.rel (%p198) target = $region32
      $region31: #{positional_encoding.1} parent=27 // pred_region
        _
      $region32: #{positional_encoding.1} parent=27 // pred_fallthru
        _
    $region28: #{positional_encoding.1} parent=5 // pred_fallthru
      _
    %p201 = scmp.le.s32.totalorder 2, %s8
    // Predicated region
    $region33: #{positional_encoding.1} parent=5 // pred_check
      %p202 = pneg %p201
    $region34: #{positional_encoding.1} parent=5 // pred_check_branch
      %204 = sbr.rel (%p202) target = $region36
    $region35: #{positional_encoding.1} parent=5 // pred_region
      %s205 = ssub.s32 %s8, 2
      // Predicated region
      $region37: #{positional_encoding.1} parent=35 // pred_check
        %p206 = pneg %p105
      $region38: #{positional_encoding.1} parent=35 // pred_check_branch
        %208 = sbr.rel (%p206) target = $region40
      $region39: #{positional_encoding.1} parent=35 // pred_region
        %p209 = scmp.lt.s32.totalorder %s20, 1
        %s210 = scalar_select %p209, %s20, 1
        %p211 = scmp.lt.s32.totalorder %s19, 0
        %s212 = scalar_select %p211, %s19, 0
        %s213 = sadd.s32 %s212, %s210
        %s214 = smul.addr %s213, 2
        %s215 = scalar_lea.vmem %s2, %s214
      $region40: #{positional_encoding.1} parent=35 // pred_fallthru
        _
    $region36: #{positional_encoding.1} parent=5 // pred_fallthru
      _
  $region6: #{positional_encoding.1} parent=0 // loop_footer
    %s12 = sadd.s32 1, %s8
  $region7: #{positional_encoding.1} parent=0 // loop_footer_branch
    %7 = sbr.rel target = $region3
  $region8: #{positional_encoding.1} parent=0 // loop_exit
    _

</llo_original>
